<compile_context>
chip_gen: v7x
topology: tpu7x:2x2x1
jax: 0.10.0
libtpu: 0.0.40
codegen_flags: <defaults>
</compile_context>

<pallas_src>
import functools
import numpy as np
import jax
import jax.numpy as jnp
from jax.experimental import pallas as pl
from jax.experimental.pallas import tpu as pltpu

H = 128  # padded lane width for the input, every hidden layer and the output


def _round_up(x, m):
    return ((x + m - 1) // m) * m


def _pad_to(a, shape):
    pads = [(0, s - d) for d, s in zip(a.shape, shape)]
    assert all(p[1] >= 0 for p in pads), f"layer dim {a.shape} exceeds pad {shape}"
    return jnp.pad(a, pads)


# ----------------------------------------------------------------------------
# Pallas kernel: one batch tile of fourier features + full MLP, all in VMEM.
# ----------------------------------------------------------------------------
def model_kernel(x_ref, fp_ref, wstack_ref, bstack_ref, out_ref, *, u_dim):
    """
    x_ref      : (TB, H)    f32 rows [u | t | 0...0]   (fourier + pad lanes zero)
    fp_ref     : (3, H)     f32 rows [2*pi*f | phi | A], zero on [u|t] and pad lanes
    wstack_ref : (7, H, H)  bf16 w1..w7, zero-padded to (H, H)
    bstack_ref : (7, H)     f32 b1..b7, zero-padded to H
    out_ref    : (TB, H)    f32 lane-dense output; caller slices [:, :out_size]
    """
    x = x_ref[...]                                     # (TB, H) f32
    fp = fp_ref[...]                                   # (3, H)  f32
    tb = x[:, u_dim:u_dim + 1]                         # (TB, 1)

    # Fourier features over the full padded width (f32 on the VPU/EUP).
    # A == 0 on the [u|t] and pad lanes and x == 0 on the fourier/pad lanes,
    # so one add realizes concat([u, t, ff]) without any lane concatenation.
    ff = fp[2:3, :] * jnp.sin(tb * fp[0:1, :] + fp[1:2, :])   # (TB, H)
    h = (x + ff).astype(jnp.bfloat16)                         # bf16 for the MXU

    b = bstack_ref[...]                                       # (7, H) f32

    # Layers 1..6: bf16 MXU matmul, f32 accumulate, bias + ReLU, back to bf16.
    # Dropout layers are identity in eval mode.
    for li in range(6):
        acc = jnp.dot(h, wstack_ref[li], preferred_element_type=jnp.float32)
        h = jnp.maximum(acc + b[li:li + 1, :], 0.0).astype(jnp.bfloat16)

    # Output layer (no activation); padded lanes stay 0.
    out_ref[...] = (
        jnp.dot(h, wstack_ref[6], preferred_element_type=jnp.float32)
        + b[6:7, :]
    )


# ----------------------------------------------------------------------------
# Wrapper: parameter packing / padding (glue) + gridded pallas_call.
# ----------------------------------------------------------------------------
@functools.partial(jax.jit, static_argnames=("u_dim", "num_modes"))
def model_forward(t, u, fourier_freqs, params, *, u_dim, num_modes):
    batch = u.shape[0]
    in_size = u_dim + 1 + num_modes
    out_size = params["b7"].shape[1]
    assert in_size <= H and out_size <= H, "layer widths must fit in 128 lanes"

    # torch-style t handling
    if t.ndim == 0:
        tb = t * jnp.ones((batch, 1), dtype=u.dtype)
    elif t.ndim == 1:
        tb = t[:, None]
    else:
        tb = t

    # x rows: [u | t | 0 ... 0], zero-padded to 128 lanes (lane-dense DMA).
    x = jnp.concatenate(
        [u.astype(jnp.float32), tb.astype(jnp.float32),
         jnp.zeros((batch, H - (u_dim + 1)), jnp.float32)], axis=1)

    # Fourier params laid out over the padded width (zeros on [u|t] and pad).
    zpref = jnp.zeros((u_dim + 1,), jnp.float32)
    ztail = jnp.zeros((H - in_size,), jnp.float32)
    omega = jnp.concatenate(
        [zpref, 2.0 * jnp.pi * fourier_freqs.reshape(-1).astype(jnp.float32), ztail])
    phi = jnp.concatenate(
        [zpref, params["phi"].reshape(-1).astype(jnp.float32), ztail])
    amp = jnp.concatenate(
        [zpref, params["A"].reshape(-1).astype(jnp.float32), ztail])
    fp = jnp.stack([omega, phi, amp])                               # (3, H)

    # Pad every Linear to (H, H) / (H,) and stack; weights in bf16 for the MXU.
    wstack = jnp.stack([_pad_to(params[f"w{i}"].astype(jnp.float32), (H, H))
                        for i in range(1, 8)]).astype(jnp.bfloat16)  # (7, H, H)
    bstack = jnp.stack([_pad_to(params[f"b{i}"].reshape(-1).astype(jnp.float32), (H,))
                        for i in range(1, 8)])                       # (7, H)

    # Batch tiling: aim for >=2 grid steps (v7x megacore) for moderate
    # batches, and up to 1024 rows per step for large batches so per-step
    # matmul work dwarfs the fixed pipeline overhead.  Weights stay resident.
    TB = max(8, _round_up((batch + 1) // 2, 8))
    TB = min(TB, 1024)
    b_pad = _round_up(batch, TB)
    if b_pad != batch:
        x = jnp.pad(x, ((0, b_pad - batch), (0, 0)))
    grid = (b_pad // TB,)

    flops = 2 * b_pad * 7 * H * H
    bytes_accessed = (4 * (x.size + b_pad * H + fp.size + bstack.size)
                      + 2 * wstack.size)
    cost = pl.CostEstimate(flops=flops,
                           transcendentals=b_pad * H,
                           bytes_accessed=bytes_accessed)

    kernel = functools.partial(model_kernel, u_dim=u_dim)

    out_padded = pl.pallas_call(
        kernel,
        out_shape=jax.ShapeDtypeStruct((b_pad, H), jnp.float32),
        grid=grid,
        in_specs=[
            pl.BlockSpec((TB, H), lambda i: (i, 0)),       # batch-tiled x
            pl.BlockSpec((3, H), lambda i: (0, 0)),        # resident fourier
            pl.BlockSpec((7, H, H), lambda i: (0, 0, 0)),  # resident w1..w7
            pl.BlockSpec((7, H), lambda i: (0, 0)),        # resident biases
        ],
        out_specs=pl.BlockSpec((TB, H), lambda i: (i, 0)),
        compiler_params=pltpu.CompilerParams(
            dimension_semantics=("parallel",)),
        cost_estimate=cost,
    )(x, fp, wstack, bstack)

    # Small copy; for very large batches callers may prefer the padded slab.
    return out_padded[:batch, :out_size]


# ----------------------------------------------------------------------------
# Parameter construction (torch.nn.Linear-like init shapes).
# ----------------------------------------------------------------------------
def make_params(key, u_dim, num_modes, hidden_sizes, output_size):
    input_size = u_dim + 1 + num_modes
    dims = [input_size] + list(hidden_sizes) + [output_size]
    params = {}
    keys = jax.random.split(key, 2 * (len(dims) - 1))
    for li in range(len(dims) - 1):
        fan_in, fan_out = dims[li], dims[li + 1]
        bound = 1.0 / np.sqrt(fan_in)
        params[f"w{li + 1}"] = jax.random.uniform(
            keys[2 * li], (fan_in, fan_out),
            minval=-bound, maxval=bound, dtype=jnp.float32)
        params[f"b{li + 1}"] = jax.random.uniform(
            keys[2 * li + 1], (1, fan_out),
            minval=-bound, maxval=bound, dtype=jnp.float32)
    params["phi"] = jnp.zeros((1, num_modes), dtype=jnp.float32)
    params["A"] = jnp.ones((1, num_modes), dtype=jnp.float32)
    return params


# ----------------------------------------------------------------------------
# Pure-JAX f32 reference for correctness check.
# ----------------------------------------------------------------------------
def reference_forward(t, u, fourier_freqs, params, u_dim, num_modes):
    batch = u.shape[0]
    if t.ndim == 0:
        tb = t * jnp.ones((batch, 1), dtype=u.dtype)
    elif t.ndim == 1:
        tb = t[:, None]
    else:
        tb = t
    feats = []
    for i in range(num_modes):
        fb = tb * (2.0 * jnp.pi * fourier_freqs[i]) + params["phi"][0, i]
        feats.append(params["A"][0, i] * jnp.sin(fb))
    ff = jnp.concatenate(feats, axis=1)
    x = jnp.concatenate([u, tb, ff], axis=1)
    for li in range(1, 7):
        x = jnp.maximum(x @ params[f"w{li}"] + params[f"b{li}"], 0.0)
    return x @ params["w7"] + params["b7"]


if __name__ == "__main__":
    batch = 8
    u_dim = 3
    num_modes = 4
    hidden_sizes = [128, 64, 128, 64, 128, 64]
    output_size = 6

    key = jax.random.PRNGKey(0)
    k_u, k_t, k_p = jax.random.split(key, 3)

    u = jax.random.normal(k_u, (batch, u_dim), dtype=jnp.float32)
    t = jax.random.uniform(k_t, (batch,), dtype=jnp.float32)
    fourier_freqs = jnp.array([1.0, 2.0, 3.0, 4.0], dtype=jnp.float32)
    params = make_params(k_p, u_dim, num_modes, hidden_sizes, output_size)

    out = model_forward(t, u, fourier_freqs, params,
                        u_dim=u_dim, num_modes=num_modes)
    out = jax.block_until_ready(out)

    ref = reference_forward(t, u, fourier_freqs, params, u_dim, num_modes)
    # bf16 MXU path vs f32 reference: relaxed tolerance.
    np.testing.assert_allclose(np.asarray(out), np.asarray(ref),
                               rtol=5e-2, atol=5e-2)

    # TODO(synk): train-mode Dropout (enable_dropout) is not implemented; the
    # kernel reproduces eval-mode forward where Dropout is the identity.
    print("KERNEL_OK")
</pallas_src>

<mosaic_0001>
module attributes {stable_mosaic.version = 11 : i64} {
  func.func @model_kernel(%arg0: i32, %arg1: memref<8x128xf32, #tpu.memory_space<vmem>>, %arg2: memref<3x128xf32, #tpu.memory_space<vmem>>, %arg3: memref<7x128x128xbf16, #tpu.memory_space<vmem>>, %arg4: memref<7x128xf32, #tpu.memory_space<vmem>>, %arg5: memref<8x128xf32, #tpu.memory_space<vmem>>) attributes {dimension_semantics = [#tpu.dimension_semantics<parallel>], iteration_bounds = array<i64: 1>, scalar_prefetch = 0 : i64, scratch_operands = 0 : i64, tpu.core_type = #tpu.core_type<tc>, window_params = [{transform_indices = @transform_0, window_bounds = array<i64: 8, 128>}, {pipeline_mode = #tpu.pipeline_mode<synchronous>, transform_indices = @transform_1, window_bounds = array<i64: 3, 128>}, {pipeline_mode = #tpu.pipeline_mode<synchronous>, transform_indices = @transform_2, window_bounds = array<i64: 7, 128, 128>}, {pipeline_mode = #tpu.pipeline_mode<synchronous>, transform_indices = @transform_3, window_bounds = array<i64: 7, 128>}, {transform_indices = @transform_4, window_bounds = array<i64: 8, 128>}]} {
    %c0 = arith.constant 0 : index
    %c0_0 = arith.constant 0 : index
    %0 = vector.load %arg1[%c0, %c0_0] : memref<8x128xf32, #tpu.memory_space<vmem>>, vector<8x128xf32>
    %c0_1 = arith.constant 0 : index
    %c0_2 = arith.constant 0 : index
    %1 = vector.load %arg2[%c0_1, %c0_2] : memref<3x128xf32, #tpu.memory_space<vmem>>, vector<3x128xf32>
    %2 = vector.extract_strided_slice %0 {offsets = [0, 3], sizes = [8, 1], strides = [1, 1]} : vector<8x128xf32> to vector<8x1xf32>
    %3 = vector.extract_strided_slice %1 {offsets = [2, 0], sizes = [1, 128], strides = [1, 1]} : vector<3x128xf32> to vector<1x128xf32>
    %4 = vector.extract_strided_slice %1 {offsets = [0, 0], sizes = [1, 128], strides = [1, 1]} : vector<3x128xf32> to vector<1x128xf32>
    %5 = vector.broadcast %2 : vector<8x1xf32> to vector<8x128xf32>
    %6 = vector.broadcast %4 : vector<1x128xf32> to vector<8x128xf32>
    %7 = arith.mulf %5, %6 : vector<8x128xf32>
    %8 = vector.extract_strided_slice %1 {offsets = [1, 0], sizes = [1, 128], strides = [1, 1]} : vector<3x128xf32> to vector<1x128xf32>
    %9 = vector.broadcast %8 : vector<1x128xf32> to vector<8x128xf32>
    %10 = arith.addf %7, %9 : vector<8x128xf32>
    %11 = math.sin %10 : vector<8x128xf32>
    %12 = vector.broadcast %3 : vector<1x128xf32> to vector<8x128xf32>
    %13 = arith.mulf %12, %11 : vector<8x128xf32>
    %14 = arith.addf %0, %13 : vector<8x128xf32>
    %15 = arith.truncf %14 : vector<8x128xf32> to vector<8x128xbf16>
    %c0_3 = arith.constant 0 : index
    %c0_4 = arith.constant 0 : index
    %16 = vector.load %arg4[%c0_3, %c0_4] : memref<7x128xf32, #tpu.memory_space<vmem>>, vector<7x128xf32>
    %c0_5 = arith.constant 0 : index
    %c0_6 = arith.constant 0 : index
    %c0_7 = arith.constant 0 : index
    %17 = vector.load %arg3[%c0_5, %c0_6, %c0_7] : memref<7x128x128xbf16, #tpu.memory_space<vmem>>, vector<1x128x128xbf16>
    %18 = vector.shape_cast %17 : vector<1x128x128xbf16> to vector<128x128xbf16>
    %cst = arith.constant dense<0.000000e+00> : vector<8x128xf32>
    %19 = tpu.matmul %15, %18, %cst {dimension_numbers = #tpu.dot_dimension_numbers<[1], [0], [0], [1], [0, 0, 1, 1], [], []>} : vector<8x128xbf16>, vector<128x128xbf16>, vector<8x128xf32> -> vector<8x128xf32>
    %20 = vector.extract_strided_slice %16 {offsets = [0, 0], sizes = [1, 128], strides = [1, 1]} : vector<7x128xf32> to vector<1x128xf32>
    %21 = vector.broadcast %20 : vector<1x128xf32> to vector<8x128xf32>
    %22 = arith.addf %19, %21 : vector<8x128xf32>
    %cst_8 = arith.constant 0.000000e+00 : f32
    %23 = vector.broadcast %cst_8 : f32 to vector<8x128xf32>
    %24 = arith.maximumf %22, %23 : vector<8x128xf32>
    %25 = arith.truncf %24 : vector<8x128xf32> to vector<8x128xbf16>
    %c1 = arith.constant 1 : index
    %c0_9 = arith.constant 0 : index
    %c0_10 = arith.constant 0 : index
    %26 = vector.load %arg3[%c1, %c0_9, %c0_10] : memref<7x128x128xbf16, #tpu.memory_space<vmem>>, vector<1x128x128xbf16>
    %27 = vector.shape_cast %26 : vector<1x128x128xbf16> to vector<128x128xbf16>
    %cst_11 = arith.constant dense<0.000000e+00> : vector<8x128xf32>
    %28 = tpu.matmul %25, %27, %cst_11 {dimension_numbers = #tpu.dot_dimension_numbers<[1], [0], [0], [1], [0, 0, 1, 1], [], []>} : vector<8x128xbf16>, vector<128x128xbf16>, vector<8x128xf32> -> vector<8x128xf32>
    %29 = vector.extract_strided_slice %16 {offsets = [1, 0], sizes = [1, 128], strides = [1, 1]} : vector<7x128xf32> to vector<1x128xf32>
    %30 = vector.broadcast %29 : vector<1x128xf32> to vector<8x128xf32>
    %31 = arith.addf %28, %30 : vector<8x128xf32>
    %cst_12 = arith.constant 0.000000e+00 : f32
    %32 = vector.broadcast %cst_12 : f32 to vector<8x128xf32>
    %33 = arith.maximumf %31, %32 : vector<8x128xf32>
    %34 = arith.truncf %33 : vector<8x128xf32> to vector<8x128xbf16>
    %c2 = arith.constant 2 : index
    %c0_13 = arith.constant 0 : index
    %c0_14 = arith.constant 0 : index
    %35 = vector.load %arg3[%c2, %c0_13, %c0_14] : memref<7x128x128xbf16, #tpu.memory_space<vmem>>, vector<1x128x128xbf16>
    %36 = vector.shape_cast %35 : vector<1x128x128xbf16> to vector<128x128xbf16>
    %cst_15 = arith.constant dense<0.000000e+00> : vector<8x128xf32>
    %37 = tpu.matmul %34, %36, %cst_15 {dimension_numbers = #tpu.dot_dimension_numbers<[1], [0], [0], [1], [0, 0, 1, 1], [], []>} : vector<8x128xbf16>, vector<128x128xbf16>, vector<8x128xf32> -> vector<8x128xf32>
    %38 = vector.extract_strided_slice %16 {offsets = [2, 0], sizes = [1, 128], strides = [1, 1]} : vector<7x128xf32> to vector<1x128xf32>
    %39 = vector.broadcast %38 : vector<1x128xf32> to vector<8x128xf32>
    %40 = arith.addf %37, %39 : vector<8x128xf32>
    %cst_16 = arith.constant 0.000000e+00 : f32
    %41 = vector.broadcast %cst_16 : f32 to vector<8x128xf32>
    %42 = arith.maximumf %40, %41 : vector<8x128xf32>
    %43 = arith.truncf %42 : vector<8x128xf32> to vector<8x128xbf16>
    %c3 = arith.constant 3 : index
    %c0_17 = arith.constant 0 : index
    %c0_18 = arith.constant 0 : index
    %44 = vector.load %arg3[%c3, %c0_17, %c0_18] : memref<7x128x128xbf16, #tpu.memory_space<vmem>>, vector<1x128x128xbf16>
    %45 = vector.shape_cast %44 : vector<1x128x128xbf16> to vector<128x128xbf16>
    %cst_19 = arith.constant dense<0.000000e+00> : vector<8x128xf32>
    %46 = tpu.matmul %43, %45, %cst_19 {dimension_numbers = #tpu.dot_dimension_numbers<[1], [0], [0], [1], [0, 0, 1, 1], [], []>} : vector<8x128xbf16>, vector<128x128xbf16>, vector<8x128xf32> -> vector<8x128xf32>
    %47 = vector.extract_strided_slice %16 {offsets = [3, 0], sizes = [1, 128], strides = [1, 1]} : vector<7x128xf32> to vector<1x128xf32>
    %48 = vector.broadcast %47 : vector<1x128xf32> to vector<8x128xf32>
    %49 = arith.addf %46, %48 : vector<8x128xf32>
    %cst_20 = arith.constant 0.000000e+00 : f32
    %50 = vector.broadcast %cst_20 : f32 to vector<8x128xf32>
    %51 = arith.maximumf %49, %50 : vector<8x128xf32>
    %52 = arith.truncf %51 : vector<8x128xf32> to vector<8x128xbf16>
    %c4 = arith.constant 4 : index
    %c0_21 = arith.constant 0 : index
    %c0_22 = arith.constant 0 : index
    %53 = vector.load %arg3[%c4, %c0_21, %c0_22] : memref<7x128x128xbf16, #tpu.memory_space<vmem>>, vector<1x128x128xbf16>
    %54 = vector.shape_cast %53 : vector<1x128x128xbf16> to vector<128x128xbf16>
    %cst_23 = arith.constant dense<0.000000e+00> : vector<8x128xf32>
    %55 = tpu.matmul %52, %54, %cst_23 {dimension_numbers = #tpu.dot_dimension_numbers<[1], [0], [0], [1], [0, 0, 1, 1], [], []>} : vector<8x128xbf16>, vector<128x128xbf16>, vector<8x128xf32> -> vector<8x128xf32>
    %56 = vector.extract_strided_slice %16 {offsets = [4, 0], sizes = [1, 128], strides = [1, 1]} : vector<7x128xf32> to vector<1x128xf32>
    %57 = vector.broadcast %56 : vector<1x128xf32> to vector<8x128xf32>
    %58 = arith.addf %55, %57 : vector<8x128xf32>
    %cst_24 = arith.constant 0.000000e+00 : f32
    %59 = vector.broadcast %cst_24 : f32 to vector<8x128xf32>
    %60 = arith.maximumf %58, %59 : vector<8x128xf32>
    %61 = arith.truncf %60 : vector<8x128xf32> to vector<8x128xbf16>
    %c5 = arith.constant 5 : index
    %c0_25 = arith.constant 0 : index
    %c0_26 = arith.constant 0 : index
    %62 = vector.load %arg3[%c5, %c0_25, %c0_26] : memref<7x128x128xbf16, #tpu.memory_space<vmem>>, vector<1x128x128xbf16>
    %63 = vector.shape_cast %62 : vector<1x128x128xbf16> to vector<128x128xbf16>
    %cst_27 = arith.constant dense<0.000000e+00> : vector<8x128xf32>
    %64 = tpu.matmul %61, %63, %cst_27 {dimension_numbers = #tpu.dot_dimension_numbers<[1], [0], [0], [1], [0, 0, 1, 1], [], []>} : vector<8x128xbf16>, vector<128x128xbf16>, vector<8x128xf32> -> vector<8x128xf32>
    %65 = vector.extract_strided_slice %16 {offsets = [5, 0], sizes = [1, 128], strides = [1, 1]} : vector<7x128xf32> to vector<1x128xf32>
    %66 = vector.broadcast %65 : vector<1x128xf32> to vector<8x128xf32>
    %67 = arith.addf %64, %66 : vector<8x128xf32>
    %cst_28 = arith.constant 0.000000e+00 : f32
    %68 = vector.broadcast %cst_28 : f32 to vector<8x128xf32>
    %69 = arith.maximumf %67, %68 : vector<8x128xf32>
    %70 = arith.truncf %69 : vector<8x128xf32> to vector<8x128xbf16>
    %c6 = arith.constant 6 : index
    %c0_29 = arith.constant 0 : index
    %c0_30 = arith.constant 0 : index
    %71 = vector.load %arg3[%c6, %c0_29, %c0_30] : memref<7x128x128xbf16, #tpu.memory_space<vmem>>, vector<1x128x128xbf16>
    %72 = vector.shape_cast %71 : vector<1x128x128xbf16> to vector<128x128xbf16>
    %cst_31 = arith.constant dense<0.000000e+00> : vector<8x128xf32>
    %73 = tpu.matmul %70, %72, %cst_31 {dimension_numbers = #tpu.dot_dimension_numbers<[1], [0], [0], [1], [0, 0, 1, 1], [], []>} : vector<8x128xbf16>, vector<128x128xbf16>, vector<8x128xf32> -> vector<8x128xf32>
    %74 = vector.extract_strided_slice %16 {offsets = [6, 0], sizes = [1, 128], strides = [1, 1]} : vector<7x128xf32> to vector<1x128xf32>
    %75 = vector.broadcast %74 : vector<1x128xf32> to vector<8x128xf32>
    %76 = arith.addf %73, %75 : vector<8x128xf32>
    %c0_32 = arith.constant 0 : index
    %c0_33 = arith.constant 0 : index
    %77 = vector.load %arg5[%c0_32, %c0_33] : memref<8x128xf32, #tpu.memory_space<vmem>>, vector<8x128xf32>
    tpu.vector_store %arg5[%c0_32, %c0_33], %76 {strides = array<i32>} : memref<8x128xf32, #tpu.memory_space<vmem>>, vector<8x128xf32>,
    return
  }
  func.func @transform_0(%arg0: i32) -> (i32, i32) {
    %c0_i32 = arith.constant 0 : i32
    %c0_i32_0 = arith.constant 0 : i32
    return %arg0, %c0_i32 : i32, i32
  }
  func.func @transform_1(%arg0: i32) -> (i32, i32) {
    %c0_i32 = arith.constant 0 : i32
    %c0_i32_0 = arith.constant 0 : i32
    %c0_i32_1 = arith.constant 0 : i32
    return %c0_i32, %c0_i32_0 : i32, i32
  }
  func.func @transform_2(%arg0: i32) -> (i32, i32, i32) {
    %c0_i32 = arith.constant 0 : i32
    %c0_i32_0 = arith.constant 0 : i32
    %c0_i32_1 = arith.constant 0 : i32
    %c0_i32_2 = arith.constant 0 : i32
    return %c0_i32, %c0_i32_0, %c0_i32_1 : i32, i32, i32
  }
  func.func @transform_3(%arg0: i32) -> (i32, i32) {
    %c0_i32 = arith.constant 0 : i32
    %c0_i32_0 = arith.constant 0 : i32
    %c0_i32_1 = arith.constant 0 : i32
    return %c0_i32, %c0_i32_0 : i32, i32
  }
  func.func @transform_4(%arg0: i32) -> (i32, i32) {
    %c0_i32 = arith.constant 0 : i32
    %c0_i32_0 = arith.constant 0 : i32
    return %arg0, %c0_i32 : i32, i32
  }
}

</mosaic_0001>

<llo_original>
// kernel: model_forward.1
$region0: #{model_forward.1}
  #allocation0 [shape = 'u32[]', space=smem, size = 0x4, offset = 0x4, fixed_abs, tag = 'smem constant byte address 0x4 - core index']
  #allocation1 [shape = 'u32[144,128]{1,0:T(1,128)}', space=vmem, size = 0x12000, scoped, tag = 'internal scratch']
  %s0 = inlined_call_operand.vmem [shape: f32[8,128], index: 0, kind: input, shape index: {}]
  %s1 = inlined_call_operand.vmem [shape: f32[3,128], index: 1, kind: input, shape index: {}]
  %s2 = inlined_call_operand.vmem [shape: bf16[7,128,128], index: 2, kind: input, shape index: {}]
  %s3 = inlined_call_operand.vmem [shape: f32[7,128], index: 3, kind: input, shape index: {}]
  %s4 = inlined_call_operand.hbm [shape: f32[8,128], index: 4, kind: output, shape index: {}]
  %s5 = sld [smem:[#allocation0]]
  $region26: #{model_forward.1} parent=0
    _
  %s7 = ssub.s32 1, %s5
  %s8 = scalar_select 0, %s7, %s5
  $region1: #{model_forward.1} parent=0
    #allocation2 [shape = 'u8[4096]{0}', space=vmem, size = 0x1000, scoped, tag = 'output window, operand 0, single buffered']
    #allocation3 [shape = 's32[1]{0}', space=sflag, size = 0x4, scoped, tag = 'scoped memory for model_forward.1']
    %9 = vsyncpa [#allocation3], 0
    // Predicated region
    $region2: #{model_forward.1} parent=1 // pred_check
      _
    $region3: #{model_forward.1} parent=1 // pred_check_branch
      %11 = sbr.rel (0) target = $region5
    $region4: #{model_forward.1} parent=1 // pred_region
      _
    $region5: #{model_forward.1} parent=1 // pred_fallthru
      _
    // Predicated region
    $region6: #{model_forward.1} parent=1 // pred_check
      _
    $region7: #{model_forward.1} parent=1 // pred_check_branch
      %13 = sbr.rel (0) target = $region9
    $region8: #{model_forward.1} parent=1 // pred_region
      _
    $region9: #{model_forward.1} parent=1 // pred_fallthru
      _
    // Predicated region
    $region10: #{model_forward.1} parent=1 // pred_check
      _
    $region11: #{model_forward.1} parent=1 // pred_check_branch
      %15 = sbr.rel (0) target = $region13
    $region12: #{model_forward.1} parent=1 // pred_region
      _
    $region13: #{model_forward.1} parent=1 // pred_fallthru
      _
    // Predicated region
    $region14: #{model_forward.1} parent=1 // pred_check
      _
    $region15: #{model_forward.1} parent=1 // pred_check_branch
      %17 = sbr.rel (0) target = $region17
    $region16: #{model_forward.1} parent=1 // pred_region
      _
    $region17: #{model_forward.1} parent=1 // pred_fallthru
      _
    %v19 = vld [vmem:[%s0] sm:$0xff]
    %v20 = vld [vmem:[%s1] sm:$0x7]
    %22 = vset.pattern.permute.xlu0 3
    %23 = vperm.xlu0 %22, %v19
    %v24 = vpop.permute.xlu0 %23
    %v26 = vlaneseq
    %v27 = vshrl.u32 %v26, 7
    %v28 = vsub.s32 0, %v27
    %v29 = vrot.slane %v20, %v28
    %v30 = vmul.f32 %v24, %v29
    %v31 = vlaneseq
    %v32 = vshrl.u32 %v31, 7
    %v33 = vsub.s32 1, %v32
    %v34 = vrot.slane %v20, %v33
    %v35 = vadd.f32 %v30, %v34
    %v36 = vand.u32 2147483647, %v35
    %vm37 = vcmp.le.f32.partialorder %v36, 0.7853982
    %vm38 = vcmp.lt.s32.totalorder %v35, 0
    %v39 = vand.u32 %v35, 2139095040
    %v40 = vshrl.u32 %v39, 23
    %v41 = vsub.s32 %v40, 127
    %v42 = vand.u32 2147483647, %v35
    %v43 = vand.u32 %v42, 8388607
    %v44 = vor.u32 %v43, 8388608
    %v45 = vsub.s32 0, %v44
    %v46 = vadd.s32 %v41, 1
    %vm47 = vcmp.gt.s32.totalorder %v46, 0
    %v48 = vsel %vm47, %v46, 0
    %v49 = vshrl.u32 %v48, 5
    %v50 = vand.u32 %v48, 31
    %v51 = vsub.s32 32, %v50
    %v52 = vshrl.u32 683565275, %v51
    %v53 = vshll.u32 683565275, %v50
    %v54 = vshrl.u32 2475754826, %v51
    %v55 = vor.u32 %v53, %v54
    %v56 = vshll.u32 2475754826, %v50
    %v57 = vshrl.u32 2131351028, %v51
    %v58 = vor.u32 %v56, %v57
    %v59 = vshll.u32 2131351028, %v50
    %v60 = vshrl.u32 2102212464, %v51
    %v61 = vor.u32 %v59, %v60
    %v62 = vshll.u32 2102212464, %v50
    %v63 = vshrl.u32 920167782, %v51
    %v64 = vor.u32 %v62, %v63
    %v65 = vshll.u32 920167782, %v50
    %v66 = vshrl.u32 1326507024, %v51
    %v67 = vor.u32 %v65, %v66
    %vm68 = vcmp.lt.s32.totalorder %v49, 1
    %vm69 = vcmp.lt.s32.totalorder %v49, 2
    %vm70 = vcmp.lt.s32.totalorder %v49, 3
    %vm71 = vcmp.lt.s32.totalorder %v49, 4
    %v72 = vsel %vm68, %v52, %v55
    %v73 = vsel %vm71, %v61, 2102212464
    %v74 = vsel %vm70, %v58, %v73
    %v75 = vsel %vm69, %v72, %v74
    %v76 = vsel %vm68, %v55, %v58
    %v77 = vsel %vm71, %v64, 920167782
    %v78 = vsel %vm70, %v61, %v77
    %v79 = vsel %vm69, %v76, %v78
    %v80 = vsel %vm68, %v58, %v61
    %v81 = vsel %vm71, %v67, 1326507024
    %v82 = vsel %vm70, %v64, %v81
    %v83 = vsel %vm69, %v80, %v82
    %v84 = vshll.u32 %v44, 8
    %v85 = vmul.u32.u64.compose %v84, %v83
    %v86 = vextract.low.u32 %v85
    %v87 = vextract.high.u32 %v85
    %v88 = vmul.u32.u64.compose %v84, %v79
    %v89 = vextract.low.u32 %v88
    %v90 = vextract.high.u32 %v88
    %v91 = vmul.u32 %v84, %v75
    %v92 = vadd.s32 %v87, %v89
    %vm93 = vc.u32 %v87, %v89
    %v94 = vadd.s32 %v90, 1
    %v95 = vsel %vm93, %v94, %v90
    %v96 = vadd.s32 %v91, %v95
    %v97 = vadd.s32 %v96, 536870912
    %v98 = vshrl.u32 %v97, 30
    %v99 = vshll.u32 %v98, 30
    %v100 = vsub.s32 %v96, %v99
    %vm101 = vcmp.lt.s32.totalorder %v100, 0
    %v102 = vsub.s32 0, %v100
    %v103 = vsel %vm101, %v102, %v100
    %v104 = vclz %v103
    %v105 = vsub.s32 %v104, 2
    %vm106 = vcmp.gt.s32.totalorder 0, %v105
    %v107 = vsel %vm106, 0, %v105
    %v108 = vsub.s32 32, %v107
    %v109 = vshll.u32 %v100, %v107
    %v110 = vshrl.u32 %v92, %v108
    %v111 = vor.u32 %v109, %v110
    %v112 = vsub.s32 4294967266, %v107
    %v113 = vadd.s32 %v112, 127
    %v114 = vshll.u32 %v113, 23
    %v115 = vor.u32 4788187, %v114
    %v116 = vand.u32 2147483647, %v115
    %v118 = vcvt.s32.f32 %v111
    %v119 = vmul.f32 %v118, %v116
    %v120 = vxor.u32 %v119, 2147483648
    %v121 = vsel %vm38, %v120, %v119
    %v122 = vsub.s32 4, %v98
    %v123 = vsel %vm38, %v122, %v98
    %v124 = vsel %vm37, %v35, %v121
    %v125 = vsel %vm37, 0, %v123
    %v126 = vcosq.f32.pop %v124
    %v127 = vsinq.f32.pop %v124
    %vm128 = vweird.f32 %v35
    %v129 = vadd.s32 %v125, 3
    %v130 = vand.u32 %v129, 3
    %vm131 = vcmp.lt.s32.totalorder %v130, 2
    %vm132 = vcmp.eq.s32.totalorder %v130, 0
    %v133 = vxor.u32 %v127, 2147483648
    %v134 = vsel %vm132, %v126, %v133
    %vm135 = vcmp.eq.s32.totalorder %v130, 2
    %v136 = vxor.u32 %v126, 2147483648
    %v137 = vsel %vm135, %v136, %v127
    %v138 = vsel %vm131, %v134, %v137
    %v139 = vsel %vm128, nan, %v138
    %v140 = vlaneseq
    %v141 = vshrl.u32 %v140, 7
    %v142 = vsub.s32 2, %v141
    %v143 = vrot.slane %v20, %v142
    %v144 = vmul.f32 %v143, %v139
    %v145 = vadd.f32 %v19, %v144
    %v146 = vpack.c.bf16 %v145, %v145
    %v147 = vld [vmem:[%s3] sm:$0x7f]
    %v148 = vld [vmem:[%s2] sm:$0xf]
    %v149 = vld [vmem:[%s2 + $0x4] sm:$0xf]
    %v150 = vld [vmem:[%s2 + $0x8] sm:$0xf]
    %v151 = vld [vmem:[%s2 + $0xc] sm:$0xf]
    %v152 = vld [vmem:[%s2 + $0x10] sm:$0xf]
    %v153 = vld [vmem:[%s2 + $0x14] sm:$0xf]
    %v154 = vld [vmem:[%s2 + $0x18] sm:$0xf]
    %v155 = vld [vmem:[%s2 + $0x1c] sm:$0xf]
    %v156 = vld [vmem:[%s2 + $0x20] sm:$0xf]
    %v157 = vld [vmem:[%s2 + $0x24] sm:$0xf]
    %v158 = vld [vmem:[%s2 + $0x28] sm:$0xf]
    %v159 = vld [vmem:[%s2 + $0x2c] sm:$0xf]
    %v160 = vld [vmem:[%s2 + $0x30] sm:$0xf]
    %v161 = vld [vmem:[%s2 + $0x34] sm:$0xf]
    %v162 = vld [vmem:[%s2 + $0x38] sm:$0xf]
    %v163 = vld [vmem:[%s2 + $0x3c] sm:$0xf]
    %v164 = vlaneseq
    %v165 = vshrl.u32 %v164, 7
    %v166 = vsub.s32 0, %v165
    %v167 = vrot.slane %v147, %v166
    %v184 = vunpack.c.l.b16 %v148
    %v185 = vunpack.c.l.b16 %v149
    %v186 = vunpack.c.l.b16 %v150
    %v187 = vunpack.c.l.b16 %v151
    %v188 = vunpack.c.l.b16 %v152
    %v189 = vunpack.c.l.b16 %v153
    %v190 = vunpack.c.l.b16 %v154
    %v191 = vunpack.c.l.b16 %v155
    %v192 = vunpack.c.l.b16 %v156
    %v193 = vunpack.c.l.b16 %v157
    %v194 = vunpack.c.l.b16 %v158
    %v195 = vunpack.c.l.b16 %v159
    %v196 = vunpack.c.l.b16 %v160
    %v197 = vunpack.c.l.b16 %v161
    %v198 = vunpack.c.l.b16 %v162
    %v199 = vunpack.c.l.b16 %v163
    %v200 = vpack.c.b16 %v185, %v184
    %v201 = vpack.c.b16 %v187, %v186
    %v202 = vpack.c.b16 %v189, %v188
    %v203 = vpack.c.b16 %v191, %v190
    %v204 = vpack.c.b16 %v193, %v192
    %v205 = vpack.c.b16 %v195, %v194
    %v206 = vpack.c.b16 %v197, %v196
    %v207 = vpack.c.b16 %v199, %v198
    %216 = vmatprep.subr.bf16.mxu0 0
    %217 = vmatpush1.bf16.msra.mxu0 %v200
    %218 = vmatprep.subr.bf16.mxu0 0
    %219 = vmatpush1.bf16.msra.mxu0 %v201
    %220 = vmatprep.subr.bf16.mxu0 0
    %221 = vmatpush1.bf16.msra.mxu0 %v202
    %222 = vmatprep.subr.bf16.mxu0 0
    %223 = vmatpush1.bf16.msra.mxu0 %v203
    %224 = vmatprep.subr.bf16.mxu0 0
    %225 = vmatpush1.bf16.msra.mxu0 %v204
    %226 = vmatprep.subr.bf16.mxu0 0
    %227 = vmatpush1.bf16.msra.mxu0 %v205
    %228 = vmatprep.subr.bf16.mxu0 0
    %229 = vmatpush1.bf16.msra.mxu0 %v206
    %230 = vmatprep.subr.bf16.mxu0 0
    %231 = vmatpush1.bf16.msra.mxu0 %v207
    %232 = vmatprep.subr.bf16.mxu0 0
    %233 = vmatpush1.bf16.msra.mxu0 0
    %234 = vmatprep.subr.bf16.mxu0 0
    %235 = vmatpush1.bf16.msra.mxu0 0
    %236 = vmatprep.subr.bf16.mxu0 0
    %237 = vmatpush1.bf16.msra.mxu0 0
    %238 = vmatprep.subr.bf16.mxu0 0
    %239 = vmatpush1.bf16.msra.mxu0 0
    %240 = vmatprep.subr.bf16.mxu0 0
    %241 = vmatpush1.bf16.msra.mxu0 0
    %242 = vmatprep.subr.bf16.mxu0 0
    %243 = vmatpush1.bf16.msra.mxu0 0
    %244 = vmatprep.subr.bf16.mxu0 0
    %245 = vmatpush1.bf16.msra.mxu0 0
    %246 = vmatprep.subr.bf16.mxu0 0
    %247 = vmatpush1.bf16.msra.mxu0 0
    %248 = vmatprep.mubr.bf16.mxu0 0
    %249 = vmatmul.mubr.bf16.gmra.mrb[0].mxu0 %v146
    %v250 = vpop.f32.mrb[0].mxu0
    %v251 = vadd.f32 %v167, %v250
    %v252 = vpop.f32.mrb[0].mxu0
    %v253 = vpop.f32.mrb[0].mxu0
    %v254 = vpop.f32.mrb[0].mxu0
    %255 = vdwg.mxu0
    %v256 = vmax.f32 %v251, 0.0
    %v257 = vpack.c.bf16 %v256, %v256
    %s258 = scalar_lea.vmem %s2, 64
    %v259 = vld [vmem:[%s258] sm:$0xf]
    %v260 = vld [vmem:[%s258 + $0x4] sm:$0xf]
    %v261 = vld [vmem:[%s258 + $0x8] sm:$0xf]
    %v262 = vld [vmem:[%s258 + $0xc] sm:$0xf]
    %v263 = vld [vmem:[%s258 + $0x10] sm:$0xf]
    %v264 = vld [vmem:[%s258 + $0x14] sm:$0xf]
    %v265 = vld [vmem:[%s258 + $0x18] sm:$0xf]
    %v266 = vld [vmem:[%s258 + $0x1c] sm:$0xf]
    %v267 = vld [vmem:[%s258 + $0x20] sm:$0xf]
    %v268 = vld [vmem:[%s258 + $0x24] sm:$0xf]
    %v269 = vld [vmem:[%s258 + $0x28] sm:$0xf]
    %v270 = vld [vmem:[%s258 + $0x2c] sm:$0xf]
    %v271 = vld [vmem:[%s258 + $0x30] sm:$0xf]
    %v272 = vld [vmem:[%s258 + $0x34] sm:$0xf]
    %v273 = vld [vmem:[%s258 + $0x38] sm:$0xf]
    %v274 = vld [vmem:[%s258 + $0x3c] sm:$0xf]
    %v275 = vlaneseq
    %v276 = vshrl.u32 %v275, 7
    %v277 = vsub.s32 1, %v276
    %v278 = vrot.slane %v147, %v277
    %v295 = vunpack.c.l.b16 %v259
    %v296 = vunpack.c.l.b16 %v260
    %v297 = vunpack.c.l.b16 %v261
    %v298 = vunpack.c.l.b16 %v262
    %v299 = vunpack.c.l.b16 %v263
    %v300 = vunpack.c.l.b16 %v264
    %v301 = vunpack.c.l.b16 %v265
    %v302 = vunpack.c.l.b16 %v266
    %v303 = vunpack.c.l.b16 %v267
    %v304 = vunpack.c.l.b16 %v268
    %v305 = vunpack.c.l.b16 %v269
    %v306 = vunpack.c.l.b16 %v270
    %v307 = vunpack.c.l.b16 %v271
    %v308 = vunpack.c.l.b16 %v272
    %v309 = vunpack.c.l.b16 %v273
    %v310 = vunpack.c.l.b16 %v274
    %v311 = vpack.c.b16 %v296, %v295
    %v312 = vpack.c.b16 %v298, %v297
    %v313 = vpack.c.b16 %v300, %v299
    %v314 = vpack.c.b16 %v302, %v301
    %v315 = vpack.c.b16 %v304, %v303
    %v316 = vpack.c.b16 %v306, %v305
    %v317 = vpack.c.b16 %v308, %v307
    %v318 = vpack.c.b16 %v310, %v309
    %327 = vmatprep.subr.bf16.mxu0 0
    %328 = vmatpush1.bf16.msra.mxu0 %v311
    %329 = vmatprep.subr.bf16.mxu0 0
    %330 = vmatpush1.bf16.msra.mxu0 %v312
    %331 = vmatprep.subr.bf16.mxu0 0
    %332 = vmatpush1.bf16.msra.mxu0 %v313
    %333 = vmatprep.subr.bf16.mxu0 0
    %334 = vmatpush1.bf16.msra.mxu0 %v314
    %335 = vmatprep.subr.bf16.mxu0 0
    %336 = vmatpush1.bf16.msra.mxu0 %v315
    %337 = vmatprep.subr.bf16.mxu0 0
    %338 = vmatpush1.bf16.msra.mxu0 %v316
    %339 = vmatprep.subr.bf16.mxu0 0
    %340 = vmatpush1.bf16.msra.mxu0 %v317
    %341 = vmatprep.subr.bf16.mxu0 0
    %342 = vmatpush1.bf16.msra.mxu0 %v318
    %343 = vmatprep.subr.bf16.mxu0 0
    %344 = vmatpush1.bf16.msra.mxu0 0
    %345 = vmatprep.subr.bf16.mxu0 0
    %346 = vmatpush1.bf16.msra.mxu0 0
    %347 = vmatprep.subr.bf16.mxu0 0
    %348 = vmatpush1.bf16.msra.mxu0 0
    %349 = vmatprep.subr.bf16.mxu0 0
    %350 = vmatpush1.bf16.msra.mxu0 0
    %351 = vmatprep.subr.bf16.mxu0 0
    %352 = vmatpush1.bf16.msra.mxu0 0
    %353 = vmatprep.subr.bf16.mxu0 0
    %354 = vmatpush1.bf16.msra.mxu0 0
    %355 = vmatprep.subr.bf16.mxu0 0
    %356 = vmatpush1.bf16.msra.mxu0 0
    %357 = vmatprep.subr.bf16.mxu0 0
    %358 = vmatpush1.bf16.msra.mxu0 0
    %359 = vmatprep.mubr.bf16.mxu0 0
    %360 = vmatmul.mubr.bf16.gmra.mrb[0].mxu0 %v257
    %v361 = vpop.f32.mrb[0].mxu0
    %v362 = vadd.f32 %v278, %v361
    %v363 = vpop.f32.mrb[0].mxu0
    %v364 = vpop.f32.mrb[0].mxu0
    %v365 = vpop.f32.mrb[0].mxu0
    %366 = vdwg.mxu0
    %v367 = vmax.f32 %v362, 0.0
    %v368 = vpack.c.bf16 %v367, %v367
    %s369 = scalar_lea.vmem %s2, 128
    %v370 = vld [vmem:[%s369] sm:$0xf]
    %v371 = vld [vmem:[%s369 + $0x4] sm:$0xf]
    %v372 = vld [vmem:[%s369 + $0x8] sm:$0xf]
    %v373 = vld [vmem:[%s369 + $0xc] sm:$0xf]
    %v374 = vld [vmem:[%s369 + $0x10] sm:$0xf]
    %v375 = vld [vmem:[%s369 + $0x14] sm:$0xf]
    %v376 = vld [vmem:[%s369 + $0x18] sm:$0xf]
    %v377 = vld [vmem:[%s369 + $0x1c] sm:$0xf]
    %v378 = vld [vmem:[%s369 + $0x20] sm:$0xf]
    %v379 = vld [vmem:[%s369 + $0x24] sm:$0xf]
    %v380 = vld [vmem:[%s369 + $0x28] sm:$0xf]
    %v381 = vld [vmem:[%s369 + $0x2c] sm:$0xf]
    %v382 = vld [vmem:[%s369 + $0x30] sm:$0xf]
    %v383 = vld [vmem:[%s369 + $0x34] sm:$0xf]
    %v384 = vld [vmem:[%s369 + $0x38] sm:$0xf]
    %v385 = vld [vmem:[%s369 + $0x3c] sm:$0xf]
    %v386 = vlaneseq
    %v387 = vshrl.u32 %v386, 7
    %v388 = vsub.s32 2, %v387
    %v389 = vrot.slane %v147, %v388
    %v406 = vunpack.c.l.b16 %v370
    %v407 = vunpack.c.l.b16 %v371
    %v408 = vunpack.c.l.b16 %v372
    %v409 = vunpack.c.l.b16 %v373
    %v410 = vunpack.c.l.b16 %v374
    %v411 = vunpack.c.l.b16 %v375
    %v412 = vunpack.c.l.b16 %v376
    %v413 = vunpack.c.l.b16 %v377
    %v414 = vunpack.c.l.b16 %v378
    %v415 = vunpack.c.l.b16 %v379
    %v416 = vunpack.c.l.b16 %v380
    %v417 = vunpack.c.l.b16 %v381
    %v418 = vunpack.c.l.b16 %v382
    %v419 = vunpack.c.l.b16 %v383
    %v420 = vunpack.c.l.b16 %v384
    %v421 = vunpack.c.l.b16 %v385
    %v422 = vpack.c.b16 %v407, %v406
    %v423 = vpack.c.b16 %v409, %v408
    %v424 = vpack.c.b16 %v411, %v410
    %v425 = vpack.c.b16 %v413, %v412
    %v426 = vpack.c.b16 %v415, %v414
    %v427 = vpack.c.b16 %v417, %v416
    %v428 = vpack.c.b16 %v419, %v418
    %v429 = vpack.c.b16 %v421, %v420
    %438 = vmatprep.subr.bf16.mxu0 0
    %439 = vmatpush1.bf16.msra.mxu0 %v422
    %440 = vmatprep.subr.bf16.mxu0 0
    %441 = vmatpush1.bf16.msra.mxu0 %v423
    %442 = vmatprep.subr.bf16.mxu0 0
    %443 = vmatpush1.bf16.msra.mxu0 %v424
    %444 = vmatprep.subr.bf16.mxu0 0
    %445 = vmatpush1.bf16.msra.mxu0 %v425
    %446 = vmatprep.subr.bf16.mxu0 0
    %447 = vmatpush1.bf16.msra.mxu0 %v426
    %448 = vmatprep.subr.bf16.mxu0 0
    %449 = vmatpush1.bf16.msra.mxu0 %v427
    %450 = vmatprep.subr.bf16.mxu0 0
    %451 = vmatpush1.bf16.msra.mxu0 %v428
    %452 = vmatprep.subr.bf16.mxu0 0
    %453 = vmatpush1.bf16.msra.mxu0 %v429
    %454 = vmatprep.subr.bf16.mxu0 0
    %455 = vmatpush1.bf16.msra.mxu0 0
    %456 = vmatprep.subr.bf16.mxu0 0
    %457 = vmatpush1.bf16.msra.mxu0 0
    %458 = vmatprep.subr.bf16.mxu0 0
    %459 = vmatpush1.bf16.msra.mxu0 0
    %460 = vmatprep.subr.bf16.mxu0 0
    %461 = vmatpush1.bf16.msra.mxu0 0
    %462 = vmatprep.subr.bf16.mxu0 0
    %463 = vmatpush1.bf16.msra.mxu0 0
    %464 = vmatprep.subr.bf16.mxu0 0
    %465 = vmatpush1.bf16.msra.mxu0 0
    %466 = vmatprep.subr.bf16.mxu0 0
    %467 = vmatpush1.bf16.msra.mxu0 0
    %468 = vmatprep.subr.bf16.mxu0 0
    %469 = vmatpush1.bf16.msra.mxu0 0
    %470 = vmatprep.mubr.bf16.mxu0 0
    %471 = vmatmul.mubr.bf16.gmra.mrb[0].mxu0 %v368
    %v472 = vpop.f32.mrb[0].mxu0
    %v473 = vadd.f32 %v389, %v472
    %v474 = vpop.f32.mrb[0].mxu0
    %v475 = vpop.f32.mrb[0].mxu0
    %v476 = vpop.f32.mrb[0].mxu0
    %477 = vdwg.mxu0
    %v478 = vmax.f32 %v473, 0.0
    %v479 = vpack.c.bf16 %v478, %v478
    %s480 = scalar_lea.vmem %s2, 192
    %v481 = vld [vmem:[%s480] sm:$0xf]
    %v482 = vld [vmem:[%s480 + $0x4] sm:$0xf]
    %v483 = vld [vmem:[%s480 + $0x8] sm:$0xf]
    %v484 = vld [vmem:[%s480 + $0xc] sm:$0xf]
    %v485 = vld [vmem:[%s480 + $0x10] sm:$0xf]
    %v486 = vld [vmem:[%s480 + $0x14] sm:$0xf]
    %v487 = vld [vmem:[%s480 + $0x18] sm:$0xf]
    %v488 = vld [vmem:[%s480 + $0x1c] sm:$0xf]
    %v489 = vld [vmem:[%s480 + $0x20] sm:$0xf]
    %v490 = vld [vmem:[%s480 + $0x24] sm:$0xf]
    %v491 = vld [vmem:[%s480 + $0x28] sm:$0xf]
    %v492 = vld [vmem:[%s480 + $0x2c] sm:$0xf]
    %v493 = vld [vmem:[%s480 + $0x30] sm:$0xf]
    %v494 = vld [vmem:[%s480 + $0x34] sm:$0xf]
    %v495 = vld [vmem:[%s480 + $0x38] sm:$0xf]
    %v496 = vld [vmem:[%s480 + $0x3c] sm:$0xf]
    %v497 = vlaneseq
    %v498 = vshrl.u32 %v497, 7
    %v499 = vsub.s32 3, %v498
    %v500 = vrot.slane %v147, %v499
    %v517 = vunpack.c.l.b16 %v481
    %v518 = vunpack.c.l.b16 %v482
    %v519 = vunpack.c.l.b16 %v483
    %v520 = vunpack.c.l.b16 %v484
    %v521 = vunpack.c.l.b16 %v485
    %v522 = vunpack.c.l.b16 %v486
    %v523 = vunpack.c.l.b16 %v487
    %v524 = vunpack.c.l.b16 %v488
    %v525 = vunpack.c.l.b16 %v489
    %v526 = vunpack.c.l.b16 %v490
    %v527 = vunpack.c.l.b16 %v491
    %v528 = vunpack.c.l.b16 %v492
    %v529 = vunpack.c.l.b16 %v493
    %v530 = vunpack.c.l.b16 %v494
    %v531 = vunpack.c.l.b16 %v495
    %v532 = vunpack.c.l.b16 %v496
    %v533 = vpack.c.b16 %v518, %v517
    %v534 = vpack.c.b16 %v520, %v519
    %v535 = vpack.c.b16 %v522, %v521
    %v536 = vpack.c.b16 %v524, %v523
    %v537 = vpack.c.b16 %v526, %v525
    %v538 = vpack.c.b16 %v528, %v527
    %v539 = vpack.c.b16 %v530, %v529
    %v540 = vpack.c.b16 %v532, %v531
    %549 = vmatprep.subr.bf16.mxu0 0
    %550 = vmatpush1.bf16.msra.mxu0 %v533
    %551 = vmatprep.subr.bf16.mxu0 0
    %552 = vmatpush1.bf16.msra.mxu0 %v534
    %553 = vmatprep.subr.bf16.mxu0 0
    %554 = vmatpush1.bf16.msra.mxu0 %v535
    %555 = vmatprep.subr.bf16.mxu0 0
    %556 = vmatpush1.bf16.msra.mxu0 %v536
    %557 = vmatprep.subr.bf16.mxu0 0
    %558 = vmatpush1.bf16.msra.mxu0 %v537
    %559 = vmatprep.subr.bf16.mxu0 0
    %560 = vmatpush1.bf16.msra.mxu0 %v538
    %561 = vmatprep.subr.bf16.mxu0 0
    %562 = vmatpush1.bf16.msra.mxu0 %v539
    %563 = vmatprep.subr.bf16.mxu0 0
    %564 = vmatpush1.bf16.msra.mxu0 %v540
    %565 = vmatprep.subr.bf16.mxu0 0
    %566 = vmatpush1.bf16.msra.mxu0 0
    %567 = vmatprep.subr.bf16.mxu0 0
    %568 = vmatpush1.bf16.msra.mxu0 0
    %569 = vmatprep.subr.bf16.mxu0 0
    %570 = vmatpush1.bf16.msra.mxu0 0
    %571 = vmatprep.subr.bf16.mxu0 0
    %572 = vmatpush1.bf16.msra.mxu0 0
    %573 = vmatprep.subr.bf16.mxu0 0
    %574 = vmatpush1.bf16.msra.mxu0 0
    %575 = vmatprep.subr.bf16.mxu0 0
    %576 = vmatpush1.bf16.msra.mxu0 0
    %577 = vmatprep.subr.bf16.mxu0 0
    %578 = vmatpush1.bf16.msra.mxu0 0
    %579 = vmatprep.subr.bf16.mxu0 0
    %580 = vmatpush1.bf16.msra.mxu0 0
    %581 = vmatprep.mubr.bf16.mxu0 0
    %582 = vmatmul.mubr.bf16.gmra.mrb[0].mxu0 %v479
    %v583 = vpop.f32.mrb[0].mxu0
    %v584 = vadd.f32 %v500, %v583
    %v585 = vpop.f32.mrb[0].mxu0
    %v586 = vpop.f32.mrb[0].mxu0
    %v587 = vpop.f32.mrb[0].mxu0
    %588 = vdwg.mxu0
    %v589 = vmax.f32 %v584, 0.0
    %v590 = vpack.c.bf16 %v589, %v589
    %s591 = scalar_lea.vmem %s2, 256
    %v592 = vld [vmem:[%s591] sm:$0xf]
    %v593 = vld [vmem:[%s591 + $0x4] sm:$0xf]
    %v594 = vld [vmem:[%s591 + $0x8] sm:$0xf]
    %v595 = vld [vmem:[%s591 + $0xc] sm:$0xf]
    %v596 = vld [vmem:[%s591 + $0x10] sm:$0xf]
    %v597 = vld [vmem:[%s591 + $0x14] sm:$0xf]
    %v598 = vld [vmem:[%s591 + $0x18] sm:$0xf]
    %v599 = vld [vmem:[%s591 + $0x1c] sm:$0xf]
    %v600 = vld [vmem:[%s591 + $0x20] sm:$0xf]
    %v601 = vld [vmem:[%s591 + $0x24] sm:$0xf]
    %v602 = vld [vmem:[%s591 + $0x28] sm:$0xf]
    %v603 = vld [vmem:[%s591 + $0x2c] sm:$0xf]
    %v604 = vld [vmem:[%s591 + $0x30] sm:$0xf]
    %v605 = vld [vmem:[%s591 + $0x34] sm:$0xf]
    %v606 = vld [vmem:[%s591 + $0x38] sm:$0xf]
    %v607 = vld [vmem:[%s591 + $0x3c] sm:$0xf]
    %v608 = vlaneseq
    %v609 = vshrl.u32 %v608, 7
    %v610 = vsub.s32 4, %v609
    %v611 = vrot.slane %v147, %v610
    %v628 = vunpack.c.l.b16 %v592
    %v629 = vunpack.c.l.b16 %v593
    %v630 = vunpack.c.l.b16 %v594
    %v631 = vunpack.c.l.b16 %v595
    %v632 = vunpack.c.l.b16 %v596
    %v633 = vunpack.c.l.b16 %v597
    %v634 = vunpack.c.l.b16 %v598
    %v635 = vunpack.c.l.b16 %v599
    %v636 = vunpack.c.l.b16 %v600
    %v637 = vunpack.c.l.b16 %v601
    %v638 = vunpack.c.l.b16 %v602
    %v639 = vunpack.c.l.b16 %v603
    %v640 = vunpack.c.l.b16 %v604
    %v641 = vunpack.c.l.b16 %v605
    %v642 = vunpack.c.l.b16 %v606
    %v643 = vunpack.c.l.b16 %v607
    %v644 = vpack.c.b16 %v629, %v628
    %v645 = vpack.c.b16 %v631, %v630
    %v646 = vpack.c.b16 %v633, %v632
    %v647 = vpack.c.b16 %v635, %v634
    %v648 = vpack.c.b16 %v637, %v636
    %v649 = vpack.c.b16 %v639, %v638
    %v650 = vpack.c.b16 %v641, %v640
    %v651 = vpack.c.b16 %v643, %v642
    %660 = vmatprep.subr.bf16.mxu0 0
    %661 = vmatpush1.bf16.msra.mxu0 %v644
    %662 = vmatprep.subr.bf16.mxu0 0
    %663 = vmatpush1.bf16.msra.mxu0 %v645
    %664 = vmatprep.subr.bf16.mxu0 0
    %665 = vmatpush1.bf16.msra.mxu0 %v646
    %666 = vmatprep.subr.bf16.mxu0 0
    %667 = vmatpush1.bf16.msra.mxu0 %v647
    %668 = vmatprep.subr.bf16.mxu0 0
    %669 = vmatpush1.bf16.msra.mxu0 %v648
    %670 = vmatprep.subr.bf16.mxu0 0
    %671 = vmatpush1.bf16.msra.mxu0 %v649
    %672 = vmatprep.subr.bf16.mxu0 0
    %673 = vmatpush1.bf16.msra.mxu0 %v650
    %674 = vmatprep.subr.bf16.mxu0 0
    %675 = vmatpush1.bf16.msra.mxu0 %v651
    %676 = vmatprep.subr.bf16.mxu0 0
    %677 = vmatpush1.bf16.msra.mxu0 0
    %678 = vmatprep.subr.bf16.mxu0 0
    %679 = vmatpush1.bf16.msra.mxu0 0
    %680 = vmatprep.subr.bf16.mxu0 0
    %681 = vmatpush1.bf16.msra.mxu0 0
    %682 = vmatprep.subr.bf16.mxu0 0
    %683 = vmatpush1.bf16.msra.mxu0 0
    %684 = vmatprep.subr.bf16.mxu0 0
    %685 = vmatpush1.bf16.msra.mxu0 0
    %686 = vmatprep.subr.bf16.mxu0 0
    %687 = vmatpush1.bf16.msra.mxu0 0
    %688 = vmatprep.subr.bf16.mxu0 0
    %689 = vmatpush1.bf16.msra.mxu0 0
    %690 = vmatprep.subr.bf16.mxu0 0
    %691 = vmatpush1.bf16.msra.mxu0 0
    %692 = vmatprep.mubr.bf16.mxu0 0
    %693 = vmatmul.mubr.bf16.gmra.mrb[0].mxu0 %v590
    %v694 = vpop.f32.mrb[0].mxu0
    %v695 = vadd.f32 %v611, %v694
    %v696 = vpop.f32.mrb[0].mxu0
    %v697 = vpop.f32.mrb[0].mxu0
    %v698 = vpop.f32.mrb[0].mxu0
    %699 = vdwg.mxu0
    %v700 = vmax.f32 %v695, 0.0
    %v701 = vpack.c.bf16 %v700, %v700
    %s702 = scalar_lea.vmem %s2, 320
    %v703 = vld [vmem:[%s702] sm:$0xf]
    %v704 = vld [vmem:[%s702 + $0x4] sm:$0xf]
    %v705 = vld [vmem:[%s702 + $0x8] sm:$0xf]
    %v706 = vld [vmem:[%s702 + $0xc] sm:$0xf]
    %v707 = vld [vmem:[%s702 + $0x10] sm:$0xf]
    %v708 = vld [vmem:[%s702 + $0x14] sm:$0xf]
    %v709 = vld [vmem:[%s702 + $0x18] sm:$0xf]
    %v710 = vld [vmem:[%s702 + $0x1c] sm:$0xf]
    %v711 = vld [vmem:[%s702 + $0x20] sm:$0xf]
    %v712 = vld [vmem:[%s702 + $0x24] sm:$0xf]
    %v713 = vld [vmem:[%s702 + $0x28] sm:$0xf]
    %v714 = vld [vmem:[%s702 + $0x2c] sm:$0xf]
    %v715 = vld [vmem:[%s702 + $0x30] sm:$0xf]
    %v716 = vld [vmem:[%s702 + $0x34] sm:$0xf]
    %v717 = vld [vmem:[%s702 + $0x38] sm:$0xf]
    %v718 = vld [vmem:[%s702 + $0x3c] sm:$0xf]
    %v719 = vlaneseq
    %v720 = vshrl.u32 %v719, 7
    %v721 = vsub.s32 5, %v720
    %v722 = vrot.slane %v147, %v721
    %v739 = vunpack.c.l.b16 %v703
    %v740 = vunpack.c.l.b16 %v704
    %v741 = vunpack.c.l.b16 %v705
    %v742 = vunpack.c.l.b16 %v706
    %v743 = vunpack.c.l.b16 %v707
    %v744 = vunpack.c.l.b16 %v708
    %v745 = vunpack.c.l.b16 %v709
    %v746 = vunpack.c.l.b16 %v710
    %v747 = vunpack.c.l.b16 %v711
    %v748 = vunpack.c.l.b16 %v712
    %v749 = vunpack.c.l.b16 %v713
    %v750 = vunpack.c.l.b16 %v714
    %v751 = vunpack.c.l.b16 %v715
    %v752 = vunpack.c.l.b16 %v716
    %v753 = vunpack.c.l.b16 %v717
    %v754 = vunpack.c.l.b16 %v718
    %v755 = vpack.c.b16 %v740, %v739
    %v756 = vpack.c.b16 %v742, %v741
    %v757 = vpack.c.b16 %v744, %v743
    %v758 = vpack.c.b16 %v746, %v745
    %v759 = vpack.c.b16 %v748, %v747
    %v760 = vpack.c.b16 %v750, %v749
    %v761 = vpack.c.b16 %v752, %v751
    %v762 = vpack.c.b16 %v754, %v753
    %771 = vmatprep.subr.bf16.mxu0 0
    %772 = vmatpush1.bf16.msra.mxu0 %v755
    %773 = vmatprep.subr.bf16.mxu0 0
    %774 = vmatpush1.bf16.msra.mxu0 %v756
    %775 = vmatprep.subr.bf16.mxu0 0
    %776 = vmatpush1.bf16.msra.mxu0 %v757
    %777 = vmatprep.subr.bf16.mxu0 0
    %778 = vmatpush1.bf16.msra.mxu0 %v758
    %779 = vmatprep.subr.bf16.mxu0 0
    %780 = vmatpush1.bf16.msra.mxu0 %v759
    %781 = vmatprep.subr.bf16.mxu0 0
    %782 = vmatpush1.bf16.msra.mxu0 %v760
    %783 = vmatprep.subr.bf16.mxu0 0
    %784 = vmatpush1.bf16.msra.mxu0 %v761
    %785 = vmatprep.subr.bf16.mxu0 0
    %786 = vmatpush1.bf16.msra.mxu0 %v762
    %787 = vmatprep.subr.bf16.mxu0 0
    %788 = vmatpush1.bf16.msra.mxu0 0
    %789 = vmatprep.subr.bf16.mxu0 0
    %790 = vmatpush1.bf16.msra.mxu0 0
    %791 = vmatprep.subr.bf16.mxu0 0
    %792 = vmatpush1.bf16.msra.mxu0 0
    %793 = vmatprep.subr.bf16.mxu0 0
    %794 = vmatpush1.bf16.msra.mxu0 0
    %795 = vmatprep.subr.bf16.mxu0 0
    %796 = vmatpush1.bf16.msra.mxu0 0
    %797 = vmatprep.subr.bf16.mxu0 0
    %798 = vmatpush1.bf16.msra.mxu0 0
    %799 = vmatprep.subr.bf16.mxu0 0
    %800 = vmatpush1.bf16.msra.mxu0 0
    %801 = vmatprep.subr.bf16.mxu0 0
    %802 = vmatpush1.bf16.msra.mxu0 0
    %803 = vmatprep.mubr.bf16.mxu0 0
    %804 = vmatmul.mubr.bf16.gmra.mrb[0].mxu0 %v701
    %v805 = vpop.f32.mrb[0].mxu0
    %v806 = vadd.f32 %v722, %v805
    %v807 = vpop.f32.mrb[0].mxu0
    %v808 = vpop.f32.mrb[0].mxu0
    %v809 = vpop.f32.mrb[0].mxu0
    %810 = vdwg.mxu0
    %v811 = vmax.f32 %v806, 0.0
    %v812 = vpack.c.bf16 %v811, %v811
    %s813 = scalar_lea.vmem %s2, 384
    %v814 = vld [vmem:[%s813] sm:$0xf]
    %v815 = vld [vmem:[%s813 + $0x4] sm:$0xf]
    %v816 = vld [vmem:[%s813 + $0x8] sm:$0xf]
    %v817 = vld [vmem:[%s813 + $0xc] sm:$0xf]
    %v818 = vld [vmem:[%s813 + $0x10] sm:$0xf]
    %v819 = vld [vmem:[%s813 + $0x14] sm:$0xf]
    %v820 = vld [vmem:[%s813 + $0x18] sm:$0xf]
    %v821 = vld [vmem:[%s813 + $0x1c] sm:$0xf]
    %v822 = vld [vmem:[%s813 + $0x20] sm:$0xf]
    %v823 = vld [vmem:[%s813 + $0x24] sm:$0xf]
    %v824 = vld [vmem:[%s813 + $0x28] sm:$0xf]
    %v825 = vld [vmem:[%s813 + $0x2c] sm:$0xf]
    %v826 = vld [vmem:[%s813 + $0x30] sm:$0xf]
    %v827 = vld [vmem:[%s813 + $0x34] sm:$0xf]
    %v828 = vld [vmem:[%s813 + $0x38] sm:$0xf]
    %v829 = vld [vmem:[%s813 + $0x3c] sm:$0xf]
    %v830 = vlaneseq
    %v831 = vshrl.u32 %v830, 7
    %v832 = vsub.s32 6, %v831
    %v833 = vrot.slane %v147, %v832
    %v850 = vunpack.c.l.b16 %v814
    %v851 = vunpack.c.l.b16 %v815
    %v852 = vunpack.c.l.b16 %v816
    %v853 = vunpack.c.l.b16 %v817
    %v854 = vunpack.c.l.b16 %v818
    %v855 = vunpack.c.l.b16 %v819
    %v856 = vunpack.c.l.b16 %v820
    %v857 = vunpack.c.l.b16 %v821
    %v858 = vunpack.c.l.b16 %v822
    %v859 = vunpack.c.l.b16 %v823
    %v860 = vunpack.c.l.b16 %v824
    %v861 = vunpack.c.l.b16 %v825
    %v862 = vunpack.c.l.b16 %v826
    %v863 = vunpack.c.l.b16 %v827
    %v864 = vunpack.c.l.b16 %v828
    %v865 = vunpack.c.l.b16 %v829
    %v866 = vpack.c.b16 %v851, %v850
    %v867 = vpack.c.b16 %v853, %v852
    %v868 = vpack.c.b16 %v855, %v854
    %v869 = vpack.c.b16 %v857, %v856
    %v870 = vpack.c.b16 %v859, %v858
    %v871 = vpack.c.b16 %v861, %v860
    %v872 = vpack.c.b16 %v863, %v862
    %v873 = vpack.c.b16 %v865, %v864
    %882 = vmatprep.subr.bf16.mxu0 0
    %883 = vmatpush1.bf16.msra.mxu0 %v866
    %884 = vmatprep.subr.bf16.mxu0 0
    %885 = vmatpush1.bf16.msra.mxu0 %v867
    %886 = vmatprep.subr.bf16.mxu0 0
    %887 = vmatpush1.bf16.msra.mxu0 %v868
    %888 = vmatprep.subr.bf16.mxu0 0
    %889 = vmatpush1.bf16.msra.mxu0 %v869
    %890 = vmatprep.subr.bf16.mxu0 0
    %891 = vmatpush1.bf16.msra.mxu0 %v870
    %892 = vmatprep.subr.bf16.mxu0 0
    %893 = vmatpush1.bf16.msra.mxu0 %v871
    %894 = vmatprep.subr.bf16.mxu0 0
    %895 = vmatpush1.bf16.msra.mxu0 %v872
    %896 = vmatprep.subr.bf16.mxu0 0
    %897 = vmatpush1.bf16.msra.mxu0 %v873
    %898 = vmatprep.subr.bf16.mxu0 0
    %899 = vmatpush1.bf16.msra.mxu0 0
    %900 = vmatprep.subr.bf16.mxu0 0
    %901 = vmatpush1.bf16.msra.mxu0 0
    %902 = vmatprep.subr.bf16.mxu0 0
    %903 = vmatpush1.bf16.msra.mxu0 0
    %904 = vmatprep.subr.bf16.mxu0 0
    %905 = vmatpush1.bf16.msra.mxu0 0
    %906 = vmatprep.subr.bf16.mxu0 0
    %907 = vmatpush1.bf16.msra.mxu0 0
    %908 = vmatprep.subr.bf16.mxu0 0
    %909 = vmatpush1.bf16.msra.mxu0 0
    %910 = vmatprep.subr.bf16.mxu0 0
    %911 = vmatpush1.bf16.msra.mxu0 0
    %912 = vmatprep.subr.bf16.mxu0 0
    %913 = vmatpush1.bf16.msra.mxu0 0
    %914 = vmatprep.mubr.bf16.mxu0 0
    %915 = vmatmul.mubr.bf16.gmra.mrb[0].mxu0 %v812
    %v916 = vpop.f32.mrb[0].mxu0
    %v917 = vadd.f32 %v833, %v916
    %v918 = vpop.f32.mrb[0].mxu0
    %v919 = vpop.f32.mrb[0].mxu0
    %v920 = vpop.f32.mrb[0].mxu0
    %921 = vdwg.mxu0
    %922 = vst [vmem:[#allocation2] sm:$0xff] %v917
    // Predicated region
    $region18: #{model_forward.1} parent=1 // pred_check
      _
    $region19: #{model_forward.1} parent=1 // pred_check_branch
      %924 = sbr.rel (0) target = $region21
    $region20: #{model_forward.1} parent=1 // pred_region
      %s926 = ssub.s32 128, 128
      %927 = vsyncadd [#allocation3], %s926
      %s929 = sshll.u32 [#allocation2], 4
      %s930 = int_to_ptr.vmem [resolvable:$true] %s929
      %932 = dma.vmem_to_hbm [thread:$0]  %s930, 128, %s4, [#allocation3]
    $region21: #{model_forward.1} parent=1 // pred_fallthru
      _
    // Predicated region
    $region22: #{model_forward.1} parent=1 // pred_check
      _
    $region23: #{model_forward.1} parent=1 // pred_check_branch
      %934 = sbr.rel (0) target = $region25
    $region24: #{model_forward.1} parent=1 // pred_region
      %935 = dma.done [#allocation3], 128
    $region25: #{model_forward.1} parent=1 // pred_fallthru
      _
    %936 = vsyncpa [#allocation3], 1

</llo_original>
